<compile_context>
chip_gen: v7x
topology: tpu7x:2x2x1
jax: 0.10.0
libtpu: 0.0.40
codegen_flags: <defaults>
</compile_context>

<pallas_src>
import functools

import jax
import jax.numpy as jnp
from jax.experimental import pallas as pl
from jax.experimental.pallas import tpu as pltpu


def _round_up(x, m):
    return (x + m - 1) // m * m


# ----------------------------------------------------------------------------
# Fused multi-layer kernel factory.
#   refs = (a, x, [wT, b, gamma, beta] * L, alphas_smem, out)
# ----------------------------------------------------------------------------
def _make_fused_gcn_kernel(n_real, n_pad, layer_orders):
    num_layers = len(layer_orders)
    use_row_mask = n_pad != n_real
    inv_n = 1.0 / float(n_real)

    def kernel(*refs):
        a_ref, x_ref = refs[0], refs[1]
        layer_refs = refs[2:2 + 4 * num_layers]
        alpha_ref = refs[2 + 4 * num_layers]      # SMEM, shape (L,)
        out_ref = refs[3 + 4 * num_layers]

        mxu_dtype = a_ref.dtype                    # f32 or bf16 (flag-controlled)
        a = a_ref[...]                             # adjacency resident across layers
        x = x_ref[...].astype(jnp.float32)

        if use_row_mask:
            # Built once, reused by every layer (JAX does not CSE broadcasts).
            row_ids = jax.lax.broadcasted_iota(jnp.int32, (n_pad, 1), 0)
            row_mask = (row_ids < n_real).astype(jnp.float32)

        for l in range(num_layers):                # static unroll over layers
            wT_ref, b_ref, g_ref, be_ref = layer_refs[4 * l:4 * l + 4]
            wT = wT_ref[...]
            xm = x.astype(mxu_dtype)

            # --- GCNConv: pick the order that keeps the N^2 matmul narrow ---
            if layer_orders[l]:                    # aggregate first: (A @ X) @ W^T
                ax = jnp.dot(a, xm, preferred_element_type=jnp.float32)
                h = jnp.dot(ax.astype(mxu_dtype), wT,
                            preferred_element_type=jnp.float32)
            else:                                  # transform first: A @ (X @ W^T)
                xw = jnp.dot(xm, wT, preferred_element_type=jnp.float32)
                h = jnp.dot(a, xw.astype(mxu_dtype),
                            preferred_element_type=jnp.float32)
            h = h + b_ref[...]

            # --- BatchNorm1d (training-mode biased stats, single pass) ---
            if use_row_mask:
                hm = h * row_mask
                s1 = jnp.sum(hm, axis=0, keepdims=True)
                s2 = jnp.sum(hm * h, axis=0, keepdims=True)
            else:
                s1 = jnp.sum(h, axis=0, keepdims=True)
                s2 = jnp.sum(h * h, axis=0, keepdims=True)
            mean = s1 * inv_n
            var = jnp.maximum(s2 * inv_n - mean * mean, 0.0)
            hn = (h - mean) * jax.lax.rsqrt(var + 1e-5)
            hn = hn * g_ref[...] + be_ref[...]

            # --- PReLU (scalar alpha from SMEM) ---
            alpha = alpha_ref[l]
            x = jnp.where(hn >= 0, hn, alpha * hn)

        out_ref[...] = x.astype(out_ref.dtype)

    return kernel


# ----------------------------------------------------------------------------
# Wrapper: pad to lane/sublane-friendly shapes, build specs, run one call.
# ----------------------------------------------------------------------------
def gcn_forward_fused(a_norm, x, params, *, use_bf16_mxu=False):
    """Fused forward pass of the whole GCN stack in a single pallas_call.

    a_norm: [N, N] normalized adjacency (f32)
    x:      [N, F0] node features
    params: list of (w[out,in], b[out], gamma[out], beta[out], alpha scalar)
    use_bf16_mxu: cast A/X/W to bf16 for the MXU (f32 accumulation). Off by
                  default to keep bit-level parity with the f32 reference.
    """
    n = int(x.shape[0])
    n_pad = _round_up(max(n, 8), 8)
    num_layers = len(params)
    mxu_dtype = jnp.bfloat16 if use_bf16_mxu else jnp.float32

    fin = int(x.shape[1])
    fin_pad = _round_up(fin, 128)

    a_p = jnp.zeros((n_pad, n_pad), jnp.float32)
    a_p = a_p.at[:n, :n].set(a_norm.astype(jnp.float32)).astype(mxu_dtype)
    x_p = jnp.zeros((n_pad, fin_pad), jnp.float32)
    x_p = x_p.at[:n, :fin].set(x.astype(jnp.float32)).astype(mxu_dtype)

    vmem = pl.BlockSpec(memory_space=pltpu.MemorySpace.VMEM)
    smem = pl.BlockSpec(memory_space=pltpu.MemorySpace.SMEM)

    args = [a_p, x_p]
    in_specs = [vmem, vmem]
    orders = []
    alphas = []

    for (w, b, gamma, beta, alpha) in params:
        fout, fin_w = int(w.shape[0]), int(w.shape[1])
        assert fin_w == fin
        fout_pad = _round_up(fout, 128)

        wT = jnp.zeros((fin_pad, fout_pad), jnp.float32)
        wT = wT.at[:fin, :fout].set(jnp.asarray(w, jnp.float32).T)
        b_p = jnp.zeros((1, fout_pad), jnp.float32).at[0, :fout].set(b)
        g_p = jnp.ones((1, fout_pad), jnp.float32).at[0, :fout].set(gamma)
        be_p = jnp.zeros((1, fout_pad), jnp.float32).at[0, :fout].set(beta)

        args += [wT.astype(mxu_dtype), b_p, g_p, be_p]
        in_specs += [vmem, vmem, vmem, vmem]

        # Aggregate-first iff the padded input width (the operand of the N^2
        # matmul in that order) is the narrower one.
        orders.append(fin_pad < fout_pad or (fin_pad == fout_pad and fin <= fout))
        alphas.append(jnp.float32(alpha))

        fin, fin_pad = fout, fout_pad

    fout_last, fout_last_pad = fin, fin_pad

    args.append(jnp.asarray(alphas, jnp.float32))   # (L,) -> SMEM
    in_specs.append(smem)

    # --- VMEM budget: everything resident at once; leave headroom for v7x (64 MiB/TC)
    bytes_needed = sum(int(a.size) * a.dtype.itemsize for a in args[:-1])
    bytes_needed += n_pad * fout_last_pad * 4
    assert bytes_needed <= 40 * 1024 * 1024, (
        "fused whole-graph GCN kernel exceeds the VMEM budget; "
        "use a tiled / block-sparse SpMM grid for graphs this large")
    # TODO(synk): tiled grid (parallel node axis, arbitrary reduction axis) +
    # block-sparse adjacency skipping for realistic graph sizes.

    kernel = _make_fused_gcn_kernel(n, n_pad, tuple(orders))

    out = pl.pallas_call(
        kernel,
        out_shape=jax.ShapeDtypeStruct((n_pad, fout_last_pad), jnp.float32),
        in_specs=in_specs,
        out_specs=vmem,
        compiler_params=pltpu.CompilerParams(
            vmem_limit_bytes=48 * 1024 * 1024),      # ~25% headroom on v7x
    )(*args)

    return out[:n, :fout_last]


# ----------------------------------------------------------------------------
# Normalized adjacency D^-1/2 (A + I_missing) D^-1/2 in plain JAX.
# ----------------------------------------------------------------------------
def gcn_normalized_adjacency(edge_index, n_nodes):
    src, dst = edge_index[0], edge_index[1]
    a = jnp.zeros((n_nodes, n_nodes), jnp.float32)
    a = a.at[dst, src].add(1.0)                   # duplicate edges accumulate (PyG parity)
    diag = jnp.diagonal(a)
    a = a + jnp.diag(jnp.where(diag > 0, 0.0, 1.0))   # add_remaining_self_loops
    deg = jnp.sum(a, axis=1)
    d_inv_sqrt = jnp.where(deg > 0, 1.0 / jnp.sqrt(deg), 0.0)
    return d_inv_sqrt[:, None] * a * d_inv_sqrt[None, :]


# ----------------------------------------------------------------------------
# GCN module: deterministic parameter init + fused forward.
# ----------------------------------------------------------------------------
class GCNPallas:
    def __init__(self, layer_sizes, key, use_bf16_mxu=False):
        assert len(layer_sizes) >= 2
        self.layer_sizes = layer_sizes
        self.use_bf16_mxu = use_bf16_mxu
        self.params = []
        for in_dim, out_dim in zip(layer_sizes[:-1], layer_sizes[1:]):
            key, wk = jax.random.split(key)
            # Glorot-style deterministic init for GCNConv.lin.weight [out, in]
            scale = jnp.sqrt(6.0 / (in_dim + out_dim))
            w = jax.random.uniform(wk, (out_dim, in_dim), jnp.float32,
                                   minval=-scale, maxval=scale)
            b = jnp.zeros((out_dim,), jnp.float32)          # GCNConv bias init
            gamma = jnp.ones((out_dim,), jnp.float32)       # BatchNorm weight
            beta = jnp.zeros((out_dim,), jnp.float32)       # BatchNorm bias
            alpha = jnp.float32(0.25)                       # PReLU init
            self.params.append((w, b, gamma, beta, alpha))

    def forward(self, x, edge_index):
        n_nodes = x.shape[0]
        a_norm = gcn_normalized_adjacency(edge_index, n_nodes)
        return gcn_forward_fused(a_norm, x, self.params,
                                 use_bf16_mxu=self.use_bf16_mxu)


# ----------------------------------------------------------------------------
if __name__ == "__main__":
    key = jax.random.PRNGKey(0)
    n_nodes = 16
    layer_sizes = [8, 32, 16]     # input_size=8, hidden=32, representation=16

    k_feat, k_model = jax.random.split(key)
    x = jax.random.normal(k_feat, (n_nodes, layer_sizes[0]), jnp.float32)

    # Deterministic undirected ring + a few chords, stored as edge_index [2, E]
    ring_src = jnp.arange(n_nodes)
    ring_dst = (ring_src + 1) % n_nodes
    chord_src = jnp.arange(0, n_nodes, 4)
    chord_dst = (chord_src + n_nodes // 2) % n_nodes
    src = jnp.concatenate([ring_src, ring_dst, chord_src, chord_dst])
    dst = jnp.concatenate([ring_dst, ring_src, chord_dst, chord_src])
    edge_index = jnp.stack([src, dst]).astype(jnp.int32)   # [2, E]

    model = GCNPallas(layer_sizes, k_model)
    out = model.forward(x, edge_index)
    out = jax.block_until_ready(out)

    assert out.shape == (n_nodes, layer_sizes[-1])
    assert jnp.all(jnp.isfinite(out))
    print("KERNEL_OK")
</pallas_src>

<mosaic_0001>
module attributes {stable_mosaic.version = 11 : i64} {
  func.func @kernel(%arg0: memref<16x16xf32, #tpu.memory_space<vmem>>, %arg1: memref<16x128xf32, #tpu.memory_space<vmem>>, %arg2: memref<128x128xf32, #tpu.memory_space<vmem>>, %arg3: memref<1x128xf32, #tpu.memory_space<vmem>>, %arg4: memref<1x128xf32, #tpu.memory_space<vmem>>, %arg5: memref<1x128xf32, #tpu.memory_space<vmem>>, %arg6: memref<128x128xf32, #tpu.memory_space<vmem>>, %arg7: memref<1x128xf32, #tpu.memory_space<vmem>>, %arg8: memref<1x128xf32, #tpu.memory_space<vmem>>, %arg9: memref<1x128xf32, #tpu.memory_space<vmem>>, %arg10: memref<2xf32, #tpu.memory_space<smem>>, %arg11: memref<16x128xf32, #tpu.memory_space<vmem>>) attributes {dimension_semantics = [], scalar_prefetch = 0 : i64, scratch_operands = 0 : i64, tpu.core_type = #tpu.core_type<tc>} {
    %c0 = arith.constant 0 : index
    %c0_0 = arith.constant 0 : index
    %0 = vector.load %arg0[%c0, %c0_0] : memref<16x16xf32, #tpu.memory_space<vmem>>, vector<16x16xf32>
    %c0_1 = arith.constant 0 : index
    %c0_2 = arith.constant 0 : index
    %1 = vector.load %arg1[%c0_1, %c0_2] : memref<16x128xf32, #tpu.memory_space<vmem>>, vector<16x128xf32>
    %c0_3 = arith.constant 0 : index
    %c0_4 = arith.constant 0 : index
    %2 = vector.load %arg2[%c0_3, %c0_4] : memref<128x128xf32, #tpu.memory_space<vmem>>, vector<128x128xf32>
    %cst = arith.constant dense<0.000000e+00> : vector<16x128xf32>
    %3 = tpu.matmul %0, %1, %cst {dimension_numbers = #tpu.dot_dimension_numbers<[1], [0], [0], [1], [0, 0, 1, 1], [], []>} : vector<16x16xf32>, vector<16x128xf32>, vector<16x128xf32> -> vector<16x128xf32>
    %cst_5 = arith.constant dense<0.000000e+00> : vector<16x128xf32>
    %4 = tpu.matmul %3, %2, %cst_5 {dimension_numbers = #tpu.dot_dimension_numbers<[1], [0], [0], [1], [0, 0, 1, 1], [], []>} : vector<16x128xf32>, vector<128x128xf32>, vector<16x128xf32> -> vector<16x128xf32>
    %c0_6 = arith.constant 0 : index
    %c0_7 = arith.constant 0 : index
    %5 = vector.load %arg3[%c0_6, %c0_7] : memref<1x128xf32, #tpu.memory_space<vmem>>, vector<1x128xf32>
    %6 = vector.broadcast %5 : vector<1x128xf32> to vector<16x128xf32>
    %7 = arith.addf %4, %6 : vector<16x128xf32>
    %cst_8 = arith.constant dense<0.000000e+00> : vector<128xf32>
    %8 = vector.multi_reduction <add>, %7, %cst_8 [0] : vector<16x128xf32> to vector<128xf32>
    %9 = vector.shape_cast %8 : vector<128xf32> to vector<1x128xf32>
    %10 = arith.mulf %7, %7 : vector<16x128xf32>
    %cst_9 = arith.constant dense<0.000000e+00> : vector<128xf32>
    %11 = vector.multi_reduction <add>, %10, %cst_9 [0] : vector<16x128xf32> to vector<128xf32>
    %12 = vector.shape_cast %11 : vector<128xf32> to vector<1x128xf32>
    %cst_10 = arith.constant 6.250000e-02 : f32
    %13 = vector.broadcast %cst_10 : f32 to vector<1x128xf32>
    %14 = arith.mulf %9, %13 : vector<1x128xf32>
    %cst_11 = arith.constant 6.250000e-02 : f32
    %15 = vector.broadcast %cst_11 : f32 to vector<1x128xf32>
    %16 = arith.mulf %12, %15 : vector<1x128xf32>
    %17 = arith.mulf %14, %14 : vector<1x128xf32>
    %18 = arith.subf %16, %17 : vector<1x128xf32>
    %cst_12 = arith.constant 0.000000e+00 : f32
    %19 = vector.broadcast %cst_12 : f32 to vector<1x128xf32>
    %20 = arith.maximumf %18, %19 : vector<1x128xf32>
    %21 = vector.broadcast %14 : vector<1x128xf32> to vector<16x128xf32>
    %22 = arith.subf %7, %21 : vector<16x128xf32>
    %cst_13 = arith.constant 9.99999974E-6 : f32
    %23 = vector.broadcast %cst_13 : f32 to vector<1x128xf32>
    %24 = arith.addf %20, %23 : vector<1x128xf32>
    %25 = math.rsqrt %24 : vector<1x128xf32>
    %26 = vector.broadcast %25 : vector<1x128xf32> to vector<16x128xf32>
    %27 = arith.mulf %22, %26 : vector<16x128xf32>
    %c0_14 = arith.constant 0 : index
    %c0_15 = arith.constant 0 : index
    %28 = vector.load %arg4[%c0_14, %c0_15] : memref<1x128xf32, #tpu.memory_space<vmem>>, vector<1x128xf32>
    %29 = vector.broadcast %28 : vector<1x128xf32> to vector<16x128xf32>
    %30 = arith.mulf %27, %29 : vector<16x128xf32>
    %c0_16 = arith.constant 0 : index
    %c0_17 = arith.constant 0 : index
    %31 = vector.load %arg5[%c0_16, %c0_17] : memref<1x128xf32, #tpu.memory_space<vmem>>, vector<1x128xf32>
    %32 = vector.broadcast %31 : vector<1x128xf32> to vector<16x128xf32>
    %33 = arith.addf %30, %32 : vector<16x128xf32>
    %c0_18 = arith.constant 0 : index
    %34 = memref.load %arg10[%c0_18] : memref<2xf32, #tpu.memory_space<smem>>
    %cst_19 = arith.constant 0.000000e+00 : f32
    %35 = vector.broadcast %cst_19 : f32 to vector<16x128xf32>
    %36 = arith.cmpf oge, %33, %35 : vector<16x128xf32>
    %37 = vector.broadcast %34 : f32 to vector<16x128xf32>
    %38 = arith.mulf %37, %33 : vector<16x128xf32>
    %39 = arith.select %36, %33, %38 : vector<16x128xi1>, vector<16x128xf32>
    %c0_20 = arith.constant 0 : index
    %c0_21 = arith.constant 0 : index
    %40 = vector.load %arg6[%c0_20, %c0_21] : memref<128x128xf32, #tpu.memory_space<vmem>>, vector<128x128xf32>
    %cst_22 = arith.constant dense<0.000000e+00> : vector<16x128xf32>
    %41 = tpu.matmul %39, %40, %cst_22 {dimension_numbers = #tpu.dot_dimension_numbers<[1], [0], [0], [1], [0, 0, 1, 1], [], []>} : vector<16x128xf32>, vector<128x128xf32>, vector<16x128xf32> -> vector<16x128xf32>
    %cst_23 = arith.constant dense<0.000000e+00> : vector<16x128xf32>
    %42 = tpu.matmul %0, %41, %cst_23 {dimension_numbers = #tpu.dot_dimension_numbers<[1], [0], [0], [1], [0, 0, 1, 1], [], []>} : vector<16x16xf32>, vector<16x128xf32>, vector<16x128xf32> -> vector<16x128xf32>
    %c0_24 = arith.constant 0 : index
    %c0_25 = arith.constant 0 : index
    %43 = vector.load %arg7[%c0_24, %c0_25] : memref<1x128xf32, #tpu.memory_space<vmem>>, vector<1x128xf32>
    %44 = vector.broadcast %43 : vector<1x128xf32> to vector<16x128xf32>
    %45 = arith.addf %42, %44 : vector<16x128xf32>
    %cst_26 = arith.constant dense<0.000000e+00> : vector<128xf32>
    %46 = vector.multi_reduction <add>, %45, %cst_26 [0] : vector<16x128xf32> to vector<128xf32>
    %47 = vector.shape_cast %46 : vector<128xf32> to vector<1x128xf32>
    %48 = arith.mulf %45, %45 : vector<16x128xf32>
    %cst_27 = arith.constant dense<0.000000e+00> : vector<128xf32>
    %49 = vector.multi_reduction <add>, %48, %cst_27 [0] : vector<16x128xf32> to vector<128xf32>
    %50 = vector.shape_cast %49 : vector<128xf32> to vector<1x128xf32>
    %cst_28 = arith.constant 6.250000e-02 : f32
    %51 = vector.broadcast %cst_28 : f32 to vector<1x128xf32>
    %52 = arith.mulf %47, %51 : vector<1x128xf32>
    %cst_29 = arith.constant 6.250000e-02 : f32
    %53 = vector.broadcast %cst_29 : f32 to vector<1x128xf32>
    %54 = arith.mulf %50, %53 : vector<1x128xf32>
    %55 = arith.mulf %52, %52 : vector<1x128xf32>
    %56 = arith.subf %54, %55 : vector<1x128xf32>
    %cst_30 = arith.constant 0.000000e+00 : f32
    %57 = vector.broadcast %cst_30 : f32 to vector<1x128xf32>
    %58 = arith.maximumf %56, %57 : vector<1x128xf32>
    %59 = vector.broadcast %52 : vector<1x128xf32> to vector<16x128xf32>
    %60 = arith.subf %45, %59 : vector<16x128xf32>
    %cst_31 = arith.constant 9.99999974E-6 : f32
    %61 = vector.broadcast %cst_31 : f32 to vector<1x128xf32>
    %62 = arith.addf %58, %61 : vector<1x128xf32>
    %63 = math.rsqrt %62 : vector<1x128xf32>
    %64 = vector.broadcast %63 : vector<1x128xf32> to vector<16x128xf32>
    %65 = arith.mulf %60, %64 : vector<16x128xf32>
    %c0_32 = arith.constant 0 : index
    %c0_33 = arith.constant 0 : index
    %66 = vector.load %arg8[%c0_32, %c0_33] : memref<1x128xf32, #tpu.memory_space<vmem>>, vector<1x128xf32>
    %67 = vector.broadcast %66 : vector<1x128xf32> to vector<16x128xf32>
    %68 = arith.mulf %65, %67 : vector<16x128xf32>
    %c0_34 = arith.constant 0 : index
    %c0_35 = arith.constant 0 : index
    %69 = vector.load %arg9[%c0_34, %c0_35] : memref<1x128xf32, #tpu.memory_space<vmem>>, vector<1x128xf32>
    %70 = vector.broadcast %69 : vector<1x128xf32> to vector<16x128xf32>
    %71 = arith.addf %68, %70 : vector<16x128xf32>
    %c1 = arith.constant 1 : index
    %72 = memref.load %arg10[%c1] : memref<2xf32, #tpu.memory_space<smem>>
    %cst_36 = arith.constant 0.000000e+00 : f32
    %73 = vector.broadcast %cst_36 : f32 to vector<16x128xf32>
    %74 = arith.cmpf oge, %71, %73 : vector<16x128xf32>
    %75 = vector.broadcast %72 : f32 to vector<16x128xf32>
    %76 = arith.mulf %75, %71 : vector<16x128xf32>
    %77 = arith.select %74, %71, %76 : vector<16x128xi1>, vector<16x128xf32>
    %c0_37 = arith.constant 0 : index
    %c0_38 = arith.constant 0 : index
    %78 = vector.load %arg11[%c0_37, %c0_38] : memref<16x128xf32, #tpu.memory_space<vmem>>, vector<16x128xf32>
    tpu.vector_store %arg11[%c0_37, %c0_38], %77 {strides = array<i32>} : memref<16x128xf32, #tpu.memory_space<vmem>>, vector<16x128xf32>,
    return
  }
}

</mosaic_0001>

<llo_original>
// kernel: tpu_custom_call.1
$region0: #{tpu_custom_call.1}
  #allocation0 [shape = 'u32[]', space=smem, size = 0x4, offset = 0x4, fixed_abs, tag = 'smem constant byte address 0x4 - core index']
  #allocation1 [shape = 'u32[144,128]{1,0:T(1,128)}', space=vmem, size = 0x12000, scoped, tag = 'internal scratch']
  %s0 = inlined_call_operand.hbm [shape: f32[16,16], index: 0, kind: input, shape index: {}]
  %s1 = inlined_call_operand.hbm [shape: f32[16,128], index: 1, kind: input, shape index: {}]
  %s2 = inlined_call_operand.hbm [shape: f32[128,128], index: 2, kind: input, shape index: {}]
  %s3 = inlined_call_operand.vmem [shape: f32[1,128], index: 3, kind: input, shape index: {}]
  %s4 = inlined_call_operand.vmem [shape: f32[1,128], index: 4, kind: input, shape index: {}]
  %s5 = inlined_call_operand.vmem [shape: f32[1,128], index: 5, kind: input, shape index: {}]
  %s6 = inlined_call_operand.hbm [shape: f32[128,128], index: 6, kind: input, shape index: {}]
  %s7 = inlined_call_operand.vmem [shape: f32[1,128], index: 7, kind: input, shape index: {}]
  %s8 = inlined_call_operand.vmem [shape: f32[1,128], index: 8, kind: input, shape index: {}]
  %s9 = inlined_call_operand.vmem [shape: f32[1,128], index: 9, kind: input, shape index: {}]
  %s10 = inlined_call_operand.vmem [shape: f32[2], index: 10, kind: input, shape index: {}]
  %s11 = inlined_call_operand.hbm [shape: f32[16,128], index: 11, kind: output, shape index: {}]
  %s12 = sld [smem:[#allocation0]]
  $region74: #{tpu_custom_call.1} parent=0
    _
  %s14 = ssub.s32 1, %s12
  %s15 = scalar_select 0, %s14, %s12
  $region1: #{tpu_custom_call.1} parent=0
    #allocation2 [shape = 'u8[8192]{0}', space=vmem, size = 0x2000, scoped, tag = 'input window, operand 0, single buffered']
    #allocation3 [shape = 's32[1]{0}', space=sflag, size = 0x4, scoped, tag = 'scoped memory for tpu_custom_call.1']
    #allocation4 [shape = 's32[1]{0}', space=sflag, size = 0x4, scoped, tag = 'scoped memory for tpu_custom_call.1']
    #allocation5 [shape = 's32[1]{0}', space=sflag, size = 0x4, scoped, tag = 'scoped memory for tpu_custom_call.1']
    #allocation6 [shape = 'u8[8192]{0}', space=vmem, size = 0x2000, scoped, tag = 'input window, operand 1, single buffered']
    #allocation7 [shape = 's32[1]{0}', space=sflag, size = 0x4, scoped, tag = 'scoped memory for tpu_custom_call.1']
    #allocation8 [shape = 'u8[65536]{0}', space=vmem, size = 0x10000, scoped, tag = 'input window, operand 2, single buffered']
    #allocation9 [shape = 'u8[65536]{0}', space=vmem, size = 0x10000, scoped, tag = 'input window, operand 6, single buffered']
    #allocation10 [shape = 's32[1]{0}', space=sflag, size = 0x4, scoped, tag = 'scoped memory for tpu_custom_call.1']
    #allocation11 [shape = 'u8[512]{0}', space=smem, size = 0x200, scoped, tag = 'input window, operand 10, single buffered']
    #allocation12 [shape = 'u8[8192]{0}', space=vmem, size = 0x2000, scoped, tag = 'output window, operand 0, single buffered']
    %16 = vsyncpa [#allocation3], 0
    %17 = vsyncpa [#allocation7], 0
    %18 = vsyncpa [#allocation10], 0
    %19 = vsyncpa [#allocation5], 0
    %20 = vsyncpa [#allocation4], 0
    // Predicated region
    $region2: #{tpu_custom_call.1} parent=1 // pred_check
      _
    $region3: #{tpu_custom_call.1} parent=1 // pred_check_branch
      %22 = sbr.rel (0) target = $region5
    $region4: #{tpu_custom_call.1} parent=1 // pred_region
      %s24 = ssub.s32 256, 256
      %25 = vsyncadd [#allocation3], %s24
      %s26 = sshll.u32 [#allocation2], 4
      %s27 = int_to_ptr.vmem [resolvable:$true] %s26
      %32 = dma.hbm_to_vmem [thread:$0]  %s0, 256, %s27, [#allocation3], 128, 128, 8
    $region5: #{tpu_custom_call.1} parent=1 // pred_fallthru
      _
    // Predicated region
    $region6: #{tpu_custom_call.1} parent=1 // pred_check
      _
    $region7: #{tpu_custom_call.1} parent=1 // pred_check_branch
      %34 = sbr.rel (0) target = $region9
    $region8: #{tpu_custom_call.1} parent=1 // pred_region
      %s36 = ssub.s32 256, 256
      %37 = vsyncadd [#allocation7], %s36
      %s38 = sshll.u32 [#allocation6], 4
      %s39 = int_to_ptr.vmem [resolvable:$true] %s38
      %44 = dma.hbm_to_vmem [thread:$0]  %s1, 256, %s39, [#allocation7], 128, 128, 8
    $region9: #{tpu_custom_call.1} parent=1 // pred_fallthru
      _
    // Predicated region
    $region10: #{tpu_custom_call.1} parent=1 // pred_check
      _
    $region11: #{tpu_custom_call.1} parent=1 // pred_check_branch
      %46 = sbr.rel (0) target = $region13
    $region12: #{tpu_custom_call.1} parent=1 // pred_region
      %s48 = ssub.s32 2048, 2048
      %49 = vsyncadd [#allocation7], %s48
      %s50 = sshll.u32 [#allocation8], 4
      %s51 = int_to_ptr.vmem [resolvable:$true] %s50
      %56 = dma.hbm_to_vmem [thread:$0]  %s2, 2048, %s51, [#allocation7], 128, 128, 8
    $region13: #{tpu_custom_call.1} parent=1 // pred_fallthru
      _
    // Predicated region
    $region14: #{tpu_custom_call.1} parent=1 // pred_check
      _
    $region15: #{tpu_custom_call.1} parent=1 // pred_check_branch
      %58 = sbr.rel (0) target = $region17
    $region16: #{tpu_custom_call.1} parent=1 // pred_region
      _
    $region17: #{tpu_custom_call.1} parent=1 // pred_fallthru
      _
    // Predicated region
    $region18: #{tpu_custom_call.1} parent=1 // pred_check
      _
    $region19: #{tpu_custom_call.1} parent=1 // pred_check_branch
      %60 = sbr.rel (0) target = $region21
    $region20: #{tpu_custom_call.1} parent=1 // pred_region
      _
    $region21: #{tpu_custom_call.1} parent=1 // pred_fallthru
      _
    // Predicated region
    $region22: #{tpu_custom_call.1} parent=1 // pred_check
      _
    $region23: #{tpu_custom_call.1} parent=1 // pred_check_branch
      %62 = sbr.rel (0) target = $region25
    $region24: #{tpu_custom_call.1} parent=1 // pred_region
      _
    $region25: #{tpu_custom_call.1} parent=1 // pred_fallthru
      _
    // Predicated region
    $region26: #{tpu_custom_call.1} parent=1 // pred_check
      _
    $region27: #{tpu_custom_call.1} parent=1 // pred_check_branch
      %64 = sbr.rel (0) target = $region29
    $region28: #{tpu_custom_call.1} parent=1 // pred_region
      %s66 = ssub.s32 2048, 2048
      %67 = vsyncadd [#allocation10], %s66
      %s68 = sshll.u32 [#allocation9], 4
      %s69 = int_to_ptr.vmem [resolvable:$true] %s68
      %74 = dma.hbm_to_vmem [thread:$0]  %s6, 2048, %s69, [#allocation10], 128, 128, 8
    $region29: #{tpu_custom_call.1} parent=1 // pred_fallthru
      _
    // Predicated region
    $region30: #{tpu_custom_call.1} parent=1 // pred_check
      _
    $region31: #{tpu_custom_call.1} parent=1 // pred_check_branch
      %76 = sbr.rel (0) target = $region33
    $region32: #{tpu_custom_call.1} parent=1 // pred_region
      _
    $region33: #{tpu_custom_call.1} parent=1 // pred_fallthru
      _
    // Predicated region
    $region34: #{tpu_custom_call.1} parent=1 // pred_check
      _
    $region35: #{tpu_custom_call.1} parent=1 // pred_check_branch
      %78 = sbr.rel (0) target = $region37
    $region36: #{tpu_custom_call.1} parent=1 // pred_region
      _
    $region37: #{tpu_custom_call.1} parent=1 // pred_fallthru
      _
    // Predicated region
    $region38: #{tpu_custom_call.1} parent=1 // pred_check
      _
    $region39: #{tpu_custom_call.1} parent=1 // pred_check_branch
      %80 = sbr.rel (0) target = $region41
    $region40: #{tpu_custom_call.1} parent=1 // pred_region
      _
    $region41: #{tpu_custom_call.1} parent=1 // pred_fallthru
      _
    // Predicated region
    $region42: #{tpu_custom_call.1} parent=1 // pred_check
      _
    $region43: #{tpu_custom_call.1} parent=1 // pred_check_branch
      %82 = sbr.rel (0) target = $region45
    $region44: #{tpu_custom_call.1} parent=1 // pred_region
      %s84 = ssub.s32 16, 16
      %85 = vsyncadd [#allocation5], %s84
      %s87 = sshll.u32 %s10, 4
      %s88 = int_to_ptr.vmem [resolvable:$true] %s87
      %90 = dma.vmem_to_smem %s88, 16, [#allocation11], [#allocation5]
    $region45: #{tpu_custom_call.1} parent=1 // pred_fallthru
      _
    // Predicated region
    $region46: #{tpu_custom_call.1} parent=1 // pred_check
      _
    $region47: #{tpu_custom_call.1} parent=1 // pred_check_branch
      %92 = sbr.rel (0) target = $region49
    $region48: #{tpu_custom_call.1} parent=1 // pred_region
      %93 = dma.done [#allocation3], 256
    $region49: #{tpu_custom_call.1} parent=1 // pred_fallthru
      _
    // Predicated region
    $region50: #{tpu_custom_call.1} parent=1 // pred_check
      _
    $region51: #{tpu_custom_call.1} parent=1 // pred_check_branch
      %95 = sbr.rel (0) target = $region53
    $region52: #{tpu_custom_call.1} parent=1 // pred_region
      %96 = dma.done [#allocation7], 256
    $region53: #{tpu_custom_call.1} parent=1 // pred_fallthru
      _
    // Predicated region
    $region54: #{tpu_custom_call.1} parent=1 // pred_check
      _
    $region55: #{tpu_custom_call.1} parent=1 // pred_check_branch
      %98 = sbr.rel (0) target = $region57
    $region56: #{tpu_custom_call.1} parent=1 // pred_region
      %99 = dma.done [#allocation7], 2048
    $region57: #{tpu_custom_call.1} parent=1 // pred_fallthru
      _
    // Predicated region
    $region58: #{tpu_custom_call.1} parent=1 // pred_check
      _
    $region59: #{tpu_custom_call.1} parent=1 // pred_check_branch
      %101 = sbr.rel (0) target = $region61
    $region60: #{tpu_custom_call.1} parent=1 // pred_region
      %102 = dma.done [#allocation10], 2048
    $region61: #{tpu_custom_call.1} parent=1 // pred_fallthru
      _
    // Predicated region
    $region62: #{tpu_custom_call.1} parent=1 // pred_check
      _
    $region63: #{tpu_custom_call.1} parent=1 // pred_check_branch
      %104 = sbr.rel (0) target = $region65
    $region64: #{tpu_custom_call.1} parent=1 // pred_region
      %105 = dma.done [#allocation5], 16
    $region65: #{tpu_custom_call.1} parent=1 // pred_fallthru
      _
    %106 = sfence
    %v107 = vld [vmem:[#allocation2] sm:$0xff]
    %v108 = vld [vmem:[#allocation2 + $0x8] sm:$0xff]
    %v109 = vld [vmem:[#allocation6] sm:$0xff]
    %v110 = vld [vmem:[#allocation6 + $0x8] sm:$0xff]
    %v111 = vld [vmem:[#allocation8] sm:$0xff]
    %v112 = vld [vmem:[#allocation8 + $0x8] sm:$0xff]
    %v113 = vld [vmem:[#allocation8 + $0x10] sm:$0xff]
    %v114 = vld [vmem:[#allocation8 + $0x18] sm:$0xff]
    %v115 = vld [vmem:[#allocation8 + $0x20] sm:$0xff]
    %v116 = vld [vmem:[#allocation8 + $0x28] sm:$0xff]
    %v117 = vld [vmem:[#allocation8 + $0x30] sm:$0xff]
    %v118 = vld [vmem:[#allocation8 + $0x38] sm:$0xff]
    %v119 = vld [vmem:[#allocation8 + $0x40] sm:$0xff]
    %v120 = vld [vmem:[#allocation8 + $0x48] sm:$0xff]
    %v121 = vld [vmem:[#allocation8 + $0x50] sm:$0xff]
    %v122 = vld [vmem:[#allocation8 + $0x58] sm:$0xff]
    %v123 = vld [vmem:[#allocation8 + $0x60] sm:$0xff]
    %v124 = vld [vmem:[#allocation8 + $0x68] sm:$0xff]
    %v125 = vld [vmem:[#allocation8 + $0x70] sm:$0xff]
    %v126 = vld [vmem:[#allocation8 + $0x78] sm:$0xff]
    %vm127 = vcmask 130048
    %v129 = vsel %vm127, %v107, 0
    %v132 = vsel %vm127, %v108, 0
    %134 = vmatprep.subr.mxu0 0.0
    %135 = vmatpush1.msra.mxu0 %v109
    %136 = vmatprep.subr.mxu0 0.0
    %137 = vmatpush1.msra.mxu0 %v110
    %138 = vmatprep.subr.mxu0 0.0
    %139 = vmatpush1.msra.mxu0 0.0
    %140 = vmatprep.subr.mxu0 0.0
    %141 = vmatpush1.msra.mxu0 0.0
    %142 = vmatprep.subr.mxu0 0.0
    %143 = vmatpush1.msra.mxu0 0.0
    %144 = vmatprep.subr.mxu0 0.0
    %145 = vmatpush1.msra.mxu0 0.0
    %146 = vmatprep.subr.mxu0 0.0
    %147 = vmatpush1.msra.mxu0 0.0
    %148 = vmatprep.subr.mxu0 0.0
    %149 = vmatpush1.msra.mxu0 0.0
    %150 = vmatprep.subr.mxu0 0.0
    %151 = vmatpush1.msra.mxu0 0.0
    %152 = vmatprep.subr.mxu0 0.0
    %153 = vmatpush1.msra.mxu0 0.0
    %154 = vmatprep.subr.mxu0 0.0
    %155 = vmatpush1.msra.mxu0 0.0
    %156 = vmatprep.subr.mxu0 0.0
    %157 = vmatpush1.msra.mxu0 0.0
    %158 = vmatprep.subr.mxu0 0.0
    %159 = vmatpush1.msra.mxu0 0.0
    %160 = vmatprep.subr.mxu0 0.0
    %161 = vmatpush1.msra.mxu0 0.0
    %162 = vmatprep.subr.mxu0 0.0
    %163 = vmatpush1.msra.mxu0 0.0
    %164 = vmatprep.subr.mxu0 0.0
    %165 = vmatpush1.msra.mxu0 0.0
    %166 = vmatprep.subr.mxu0 0.0
    %167 = vmatpush1.msra.mxu0 0.0
    %168 = vmatprep.subr.mxu0 0.0
    %169 = vmatpush1.msra.mxu0 0.0
    %170 = vmatprep.subr.mxu0 0.0
    %171 = vmatpush1.msra.mxu0 0.0
    %172 = vmatprep.subr.mxu0 0.0
    %173 = vmatpush1.msra.mxu0 0.0
    %174 = vmatprep.subr.mxu0 0.0
    %175 = vmatpush1.msra.mxu0 0.0
    %176 = vmatprep.subr.mxu0 0.0
    %177 = vmatpush1.msra.mxu0 0.0
    %178 = vmatprep.subr.mxu0 0.0
    %179 = vmatpush1.msra.mxu0 0.0
    %180 = vmatprep.subr.mxu0 0.0
    %181 = vmatpush1.msra.mxu0 0.0
    %182 = vmatprep.subr.mxu0 0.0
    %183 = vmatpush1.msra.mxu0 0.0
    %184 = vmatprep.subr.mxu0 0.0
    %185 = vmatpush1.msra.mxu0 0.0
    %186 = vmatprep.subr.mxu0 0.0
    %187 = vmatpush1.msra.mxu0 0.0
    %188 = vmatprep.subr.mxu0 0.0
    %189 = vmatpush1.msra.mxu0 0.0
    %190 = vmatprep.subr.mxu0 0.0
    %191 = vmatpush1.msra.mxu0 0.0
    %192 = vmatprep.subr.mxu0 0.0
    %193 = vmatpush1.msra.mxu0 0.0
    %194 = vmatprep.subr.mxu0 0.0
    %195 = vmatpush1.msra.mxu0 0.0
    %196 = vmatprep.subr.mxu0 0.0
    %197 = vmatpush1.msra.mxu0 0.0
    %198 = vmatprep.mubr.f32.mxu0 0.0
    %199 = vmatmul.mubr.f32.gmra.mrb[0].mxu0 %v129
    %v200 = vpop.f32.mrb[0].mxu0
    %v201 = vadd.f32 0.0, %v200
    %v202 = vpop.f32.mrb[0].mxu0
    %203 = vmatprep.mubr.f32.mxu0 0.0
    %204 = vmatmul.mubr.f32.gmra.mrb[0].mxu0 %v132
    %v205 = vpop.f32.mrb[0].mxu0
    %v206 = vadd.f32 0.0, %v205
    %v207 = vpop.f32.mrb[0].mxu0
    %208 = vdwg.mxu0
    %v209 = vld [vmem:[%s3] sm:$0x1]
    %v211 = vlaneseq
    %v212 = vshrl.u32 %v211, 7
    %v213 = vsub.s32 0, %v212
    %v214 = vrot.slane %v209, %v213
    %216 = vmatprep.subr.mxu0 0.0
    %217 = vmatpush1.msra.mxu0 %v111
    %218 = vmatprep.subr.mxu0 0.0
    %219 = vmatpush1.msra.mxu0 %v112
    %220 = vmatprep.subr.mxu0 0.0
    %221 = vmatpush1.msra.mxu0 %v113
    %222 = vmatprep.subr.mxu0 0.0
    %223 = vmatpush1.msra.mxu0 %v114
    %224 = vmatprep.subr.mxu0 0.0
    %225 = vmatpush1.msra.mxu0 %v115
    %226 = vmatprep.subr.mxu0 0.0
    %227 = vmatpush1.msra.mxu0 %v116
    %228 = vmatprep.subr.mxu0 0.0
    %229 = vmatpush1.msra.mxu0 %v117
    %230 = vmatprep.subr.mxu0 0.0
    %231 = vmatpush1.msra.mxu0 %v118
    %232 = vmatprep.subr.mxu0 0.0
    %233 = vmatpush1.msra.mxu0 %v119
    %234 = vmatprep.subr.mxu0 0.0
    %235 = vmatpush1.msra.mxu0 %v120
    %236 = vmatprep.subr.mxu0 0.0
    %237 = vmatpush1.msra.mxu0 %v121
    %238 = vmatprep.subr.mxu0 0.0
    %239 = vmatpush1.msra.mxu0 %v122
    %240 = vmatprep.subr.mxu0 0.0
    %241 = vmatpush1.msra.mxu0 %v123
    %242 = vmatprep.subr.mxu0 0.0
    %243 = vmatpush1.msra.mxu0 %v124
    %244 = vmatprep.subr.mxu0 0.0
    %245 = vmatpush1.msra.mxu0 %v125
    %246 = vmatprep.subr.mxu0 0.0
    %247 = vmatpush1.msra.mxu0 %v126
    %248 = vmatprep.subr.mxu0 0.0
    %249 = vmatpush1.msra.mxu0 0.0
    %250 = vmatprep.subr.mxu0 0.0
    %251 = vmatpush1.msra.mxu0 0.0
    %252 = vmatprep.subr.mxu0 0.0
    %253 = vmatpush1.msra.mxu0 0.0
    %254 = vmatprep.subr.mxu0 0.0
    %255 = vmatpush1.msra.mxu0 0.0
    %256 = vmatprep.subr.mxu0 0.0
    %257 = vmatpush1.msra.mxu0 0.0
    %258 = vmatprep.subr.mxu0 0.0
    %259 = vmatpush1.msra.mxu0 0.0
    %260 = vmatprep.subr.mxu0 0.0
    %261 = vmatpush1.msra.mxu0 0.0
    %262 = vmatprep.subr.mxu0 0.0
    %263 = vmatpush1.msra.mxu0 0.0
    %264 = vmatprep.subr.mxu0 0.0
    %265 = vmatpush1.msra.mxu0 0.0
    %266 = vmatprep.subr.mxu0 0.0
    %267 = vmatpush1.msra.mxu0 0.0
    %268 = vmatprep.subr.mxu0 0.0
    %269 = vmatpush1.msra.mxu0 0.0
    %270 = vmatprep.subr.mxu0 0.0
    %271 = vmatpush1.msra.mxu0 0.0
    %272 = vmatprep.subr.mxu0 0.0
    %273 = vmatpush1.msra.mxu0 0.0
    %274 = vmatprep.subr.mxu0 0.0
    %275 = vmatpush1.msra.mxu0 0.0
    %276 = vmatprep.subr.mxu0 0.0
    %277 = vmatpush1.msra.mxu0 0.0
    %278 = vmatprep.subr.mxu0 0.0
    %279 = vmatpush1.msra.mxu0 0.0
    %280 = vmatprep.mubr.f32.mxu0 0.0
    %281 = vmatmul.mubr.f32.gmra.mrb[0].mxu0 %v201
    %v282 = vpop.f32.mrb[0].mxu0
    %v283 = vadd.f32 %v214, %v282
    %v284 = vpop.f32.mrb[0].mxu0
    %285 = vmatprep.mubr.f32.mxu0 0.0
    %286 = vmatmul.mubr.f32.gmra.mrb[0].mxu0 %v206
    %v287 = vpop.f32.mrb[0].mxu0
    %v288 = vadd.f32 %v214, %v287
    %v289 = vpop.f32.mrb[0].mxu0
    %290 = vdwg.mxu0
    %v291 = vadd.f32 %v283, %v288
    %v292 = vrot.slane %v291, 4
    %v293 = vadd.f32 %v291, %v292
    %v294 = vrot.slane %v293, 2
    %v295 = vadd.f32 %v293, %v294
    %v296 = vrot.slane %v295, 1
    %v297 = vadd.f32 %v295, %v296
    %v298 = vmul.f32 %v283, %v283
    %v299 = vmul.f32 %v288, %v288
    %v300 = vadd.f32 %v298, %v299
    %v301 = vrot.slane %v300, 4
    %v302 = vadd.f32 %v300, %v301
    %v303 = vrot.slane %v302, 2
    %v304 = vadd.f32 %v302, %v303
    %v305 = vrot.slane %v304, 1
    %v306 = vadd.f32 %v304, %v305
    %v307 = vmul.f32 %v297, 0.0625
    %v308 = vmul.f32 %v306, 0.0625
    %v309 = vmul.f32 %v307, %v307
    %v310 = vsub.f32 %v308, %v309
    %v311 = vmax.f32 %v310, 0.0
    %v312 = vsub.f32 %v283, %v307
    %v313 = vsub.f32 %v288, %v307
    %v314 = vadd.f32 %v311, 1e-05
    %v315 = vrsqrt.pop %v314
    %v316 = vmul.f32 %v312, %v315
    %v317 = vmul.f32 %v313, %v315
    %v318 = vld [vmem:[%s4] sm:$0x1]
    %v320 = vlaneseq
    %v321 = vshrl.u32 %v320, 7
    %v322 = vsub.s32 0, %v321
    %v323 = vrot.slane %v318, %v322
    %v325 = vmul.f32 %v316, %v323
    %v326 = vmul.f32 %v317, %v323
    %v327 = vld [vmem:[%s5] sm:$0x1]
    %v329 = vlaneseq
    %v330 = vshrl.u32 %v329, 7
    %v331 = vsub.s32 0, %v330
    %v332 = vrot.slane %v327, %v331
    %v334 = vadd.f32 %v325, %v332
    %v335 = vadd.f32 %v326, %v332
    %s336 = sld [smem:[#allocation11]]
    %vm337 = vcmp.ge.f32.partialorder %v334, 0.0
    %vm338 = vcmp.ge.f32.partialorder %v335, 0.0
    %v339 = vstv %s336
    %v340 = vmul.f32 %v339, %v334
    %v341 = vmul.f32 %v339, %v335
    %v342 = vsel %vm337, %v334, %v340
    %v343 = vsel %vm338, %v335, %v341
    %v344 = vld [vmem:[#allocation9] sm:$0xff]
    %v345 = vld [vmem:[#allocation9 + $0x8] sm:$0xff]
    %v346 = vld [vmem:[#allocation9 + $0x10] sm:$0xff]
    %v347 = vld [vmem:[#allocation9 + $0x18] sm:$0xff]
    %v348 = vld [vmem:[#allocation9 + $0x20] sm:$0xff]
    %v349 = vld [vmem:[#allocation9 + $0x28] sm:$0xff]
    %v350 = vld [vmem:[#allocation9 + $0x30] sm:$0xff]
    %v351 = vld [vmem:[#allocation9 + $0x38] sm:$0xff]
    %v352 = vld [vmem:[#allocation9 + $0x40] sm:$0xff]
    %v353 = vld [vmem:[#allocation9 + $0x48] sm:$0xff]
    %v354 = vld [vmem:[#allocation9 + $0x50] sm:$0xff]
    %v355 = vld [vmem:[#allocation9 + $0x58] sm:$0xff]
    %v356 = vld [vmem:[#allocation9 + $0x60] sm:$0xff]
    %v357 = vld [vmem:[#allocation9 + $0x68] sm:$0xff]
    %v358 = vld [vmem:[#allocation9 + $0x70] sm:$0xff]
    %v359 = vld [vmem:[#allocation9 + $0x78] sm:$0xff]
    %360 = vmatprep.subr.mxu0 0.0
    %361 = vmatpush1.msra.mxu0 %v344
    %362 = vmatprep.subr.mxu0 0.0
    %363 = vmatpush1.msra.mxu0 %v345
    %364 = vmatprep.subr.mxu0 0.0
    %365 = vmatpush1.msra.mxu0 %v346
    %366 = vmatprep.subr.mxu0 0.0
    %367 = vmatpush1.msra.mxu0 %v347
    %368 = vmatprep.subr.mxu0 0.0
    %369 = vmatpush1.msra.mxu0 %v348
    %370 = vmatprep.subr.mxu0 0.0
    %371 = vmatpush1.msra.mxu0 %v349
    %372 = vmatprep.subr.mxu0 0.0
    %373 = vmatpush1.msra.mxu0 %v350
    %374 = vmatprep.subr.mxu0 0.0
    %375 = vmatpush1.msra.mxu0 %v351
    %376 = vmatprep.subr.mxu0 0.0
    %377 = vmatpush1.msra.mxu0 %v352
    %378 = vmatprep.subr.mxu0 0.0
    %379 = vmatpush1.msra.mxu0 %v353
    %380 = vmatprep.subr.mxu0 0.0
    %381 = vmatpush1.msra.mxu0 %v354
    %382 = vmatprep.subr.mxu0 0.0
    %383 = vmatpush1.msra.mxu0 %v355
    %384 = vmatprep.subr.mxu0 0.0
    %385 = vmatpush1.msra.mxu0 %v356
    %386 = vmatprep.subr.mxu0 0.0
    %387 = vmatpush1.msra.mxu0 %v357
    %388 = vmatprep.subr.mxu0 0.0
    %389 = vmatpush1.msra.mxu0 %v358
    %390 = vmatprep.subr.mxu0 0.0
    %391 = vmatpush1.msra.mxu0 %v359
    %392 = vmatprep.subr.mxu0 0.0
    %393 = vmatpush1.msra.mxu0 0.0
    %394 = vmatprep.subr.mxu0 0.0
    %395 = vmatpush1.msra.mxu0 0.0
    %396 = vmatprep.subr.mxu0 0.0
    %397 = vmatpush1.msra.mxu0 0.0
    %398 = vmatprep.subr.mxu0 0.0
    %399 = vmatpush1.msra.mxu0 0.0
    %400 = vmatprep.subr.mxu0 0.0
    %401 = vmatpush1.msra.mxu0 0.0
    %402 = vmatprep.subr.mxu0 0.0
    %403 = vmatpush1.msra.mxu0 0.0
    %404 = vmatprep.subr.mxu0 0.0
    %405 = vmatpush1.msra.mxu0 0.0
    %406 = vmatprep.subr.mxu0 0.0
    %407 = vmatpush1.msra.mxu0 0.0
    %408 = vmatprep.subr.mxu0 0.0
    %409 = vmatpush1.msra.mxu0 0.0
    %410 = vmatprep.subr.mxu0 0.0
    %411 = vmatpush1.msra.mxu0 0.0
    %412 = vmatprep.subr.mxu0 0.0
    %413 = vmatpush1.msra.mxu0 0.0
    %414 = vmatprep.subr.mxu0 0.0
    %415 = vmatpush1.msra.mxu0 0.0
    %416 = vmatprep.subr.mxu0 0.0
    %417 = vmatpush1.msra.mxu0 0.0
    %418 = vmatprep.subr.mxu0 0.0
    %419 = vmatpush1.msra.mxu0 0.0
    %420 = vmatprep.subr.mxu0 0.0
    %421 = vmatpush1.msra.mxu0 0.0
    %422 = vmatprep.subr.mxu0 0.0
    %423 = vmatpush1.msra.mxu0 0.0
    %424 = vmatprep.mubr.f32.mxu0 0.0
    %425 = vmatmul.mubr.f32.gmra.mrb[0].mxu0 %v342
    %v426 = vpop.f32.mrb[0].mxu0
    %v427 = vadd.f32 0.0, %v426
    %v428 = vpop.f32.mrb[0].mxu0
    %429 = vmatprep.mubr.f32.mxu0 0.0
    %430 = vmatmul.mubr.f32.gmra.mrb[0].mxu0 %v343
    %v431 = vpop.f32.mrb[0].mxu0
    %v432 = vadd.f32 0.0, %v431
    %v433 = vpop.f32.mrb[0].mxu0
    %434 = vdwg.mxu0
    %v435 = vld [vmem:[%s7] sm:$0x1]
    %v437 = vlaneseq
    %v438 = vshrl.u32 %v437, 7
    %v439 = vsub.s32 0, %v438
    %v440 = vrot.slane %v435, %v439
    %442 = vmatprep.subr.mxu0 0.0
    %443 = vmatpush1.msra.mxu0 %v427
    %444 = vmatprep.subr.mxu0 0.0
    %445 = vmatpush1.msra.mxu0 %v432
    %446 = vmatprep.subr.mxu0 0.0
    %447 = vmatpush1.msra.mxu0 0.0
    %448 = vmatprep.subr.mxu0 0.0
    %449 = vmatpush1.msra.mxu0 0.0
    %450 = vmatprep.subr.mxu0 0.0
    %451 = vmatpush1.msra.mxu0 0.0
    %452 = vmatprep.subr.mxu0 0.0
    %453 = vmatpush1.msra.mxu0 0.0
    %454 = vmatprep.subr.mxu0 0.0
    %455 = vmatpush1.msra.mxu0 0.0
    %456 = vmatprep.subr.mxu0 0.0
    %457 = vmatpush1.msra.mxu0 0.0
    %458 = vmatprep.subr.mxu0 0.0
    %459 = vmatpush1.msra.mxu0 0.0
    %460 = vmatprep.subr.mxu0 0.0
    %461 = vmatpush1.msra.mxu0 0.0
    %462 = vmatprep.subr.mxu0 0.0
    %463 = vmatpush1.msra.mxu0 0.0
    %464 = vmatprep.subr.mxu0 0.0
    %465 = vmatpush1.msra.mxu0 0.0
    %466 = vmatprep.subr.mxu0 0.0
    %467 = vmatpush1.msra.mxu0 0.0
    %468 = vmatprep.subr.mxu0 0.0
    %469 = vmatpush1.msra.mxu0 0.0
    %470 = vmatprep.subr.mxu0 0.0
    %471 = vmatpush1.msra.mxu0 0.0
    %472 = vmatprep.subr.mxu0 0.0
    %473 = vmatpush1.msra.mxu0 0.0
    %474 = vmatprep.subr.mxu0 0.0
    %475 = vmatpush1.msra.mxu0 0.0
    %476 = vmatprep.subr.mxu0 0.0
    %477 = vmatpush1.msra.mxu0 0.0
    %478 = vmatprep.subr.mxu0 0.0
    %479 = vmatpush1.msra.mxu0 0.0
    %480 = vmatprep.subr.mxu0 0.0
    %481 = vmatpush1.msra.mxu0 0.0
    %482 = vmatprep.subr.mxu0 0.0
    %483 = vmatpush1.msra.mxu0 0.0
    %484 = vmatprep.subr.mxu0 0.0
    %485 = vmatpush1.msra.mxu0 0.0
    %486 = vmatprep.subr.mxu0 0.0
    %487 = vmatpush1.msra.mxu0 0.0
    %488 = vmatprep.subr.mxu0 0.0
    %489 = vmatpush1.msra.mxu0 0.0
    %490 = vmatprep.subr.mxu0 0.0
    %491 = vmatpush1.msra.mxu0 0.0
    %492 = vmatprep.subr.mxu0 0.0
    %493 = vmatpush1.msra.mxu0 0.0
    %494 = vmatprep.subr.mxu0 0.0
    %495 = vmatpush1.msra.mxu0 0.0
    %496 = vmatprep.subr.mxu0 0.0
    %497 = vmatpush1.msra.mxu0 0.0
    %498 = vmatprep.subr.mxu0 0.0
    %499 = vmatpush1.msra.mxu0 0.0
    %500 = vmatprep.subr.mxu0 0.0
    %501 = vmatpush1.msra.mxu0 0.0
    %502 = vmatprep.subr.mxu0 0.0
    %503 = vmatpush1.msra.mxu0 0.0
    %504 = vmatprep.subr.mxu0 0.0
    %505 = vmatpush1.msra.mxu0 0.0
    %506 = vmatprep.mubr.f32.mxu0 0.0
    %507 = vmatmul.mubr.f32.gmra.mrb[0].mxu0 %v129
    %v508 = vpop.f32.mrb[0].mxu0
    %v509 = vadd.f32 %v440, %v508
    %v510 = vpop.f32.mrb[0].mxu0
    %511 = vmatprep.mubr.f32.mxu0 0.0
    %512 = vmatmul.mubr.f32.gmra.mrb[0].mxu0 %v132
    %v513 = vpop.f32.mrb[0].mxu0
    %v514 = vadd.f32 %v440, %v513
    %v515 = vpop.f32.mrb[0].mxu0
    %516 = vdwg.mxu0
    %v517 = vadd.f32 %v509, %v514
    %v518 = vrot.slane %v517, 4
    %v519 = vadd.f32 %v517, %v518
    %v520 = vrot.slane %v519, 2
    %v521 = vadd.f32 %v519, %v520
    %v522 = vrot.slane %v521, 1
    %v523 = vadd.f32 %v521, %v522
    %v524 = vmul.f32 %v509, %v509
    %v525 = vmul.f32 %v514, %v514
    %v526 = vadd.f32 %v524, %v525
    %v527 = vrot.slane %v526, 4
    %v528 = vadd.f32 %v526, %v527
    %v529 = vrot.slane %v528, 2
    %v530 = vadd.f32 %v528, %v529
    %v531 = vrot.slane %v530, 1
    %v532 = vadd.f32 %v530, %v531
    %v533 = vmul.f32 %v523, 0.0625
    %v534 = vmul.f32 %v532, 0.0625
    %v535 = vmul.f32 %v533, %v533
    %v536 = vsub.f32 %v534, %v535
    %v537 = vmax.f32 %v536, 0.0
    %v538 = vsub.f32 %v509, %v533
    %v539 = vsub.f32 %v514, %v533
    %v540 = vadd.f32 %v537, 1e-05
    %v541 = vrsqrt.pop %v540
    %v542 = vmul.f32 %v538, %v541
    %v543 = vmul.f32 %v539, %v541
    %v544 = vld [vmem:[%s8] sm:$0x1]
    %v546 = vlaneseq
    %v547 = vshrl.u32 %v546, 7
    %v548 = vsub.s32 0, %v547
    %v549 = vrot.slane %v544, %v548
    %v551 = vmul.f32 %v542, %v549
    %v552 = vmul.f32 %v543, %v549
    %v553 = vld [vmem:[%s9] sm:$0x1]
    %v555 = vlaneseq
    %v556 = vshrl.u32 %v555, 7
    %v557 = vsub.s32 0, %v556
    %v558 = vrot.slane %v553, %v557
    %v560 = vadd.f32 %v551, %v558
    %v561 = vadd.f32 %v552, %v558
    %s562 = sld [smem:[#allocation11 + $0x1]]
    %vm563 = vcmp.ge.f32.partialorder %v560, 0.0
    %vm564 = vcmp.ge.f32.partialorder %v561, 0.0
    %v565 = vstv %s562
    %v566 = vmul.f32 %v565, %v560
    %v567 = vmul.f32 %v565, %v561
    %v568 = vsel %vm563, %v560, %v566
    %v569 = vsel %vm564, %v561, %v567
    %570 = vst [vmem:[#allocation12] sm:$0xff] %v568
    %571 = vst [vmem:[#allocation12 + $0x8] sm:$0xff] %v569
    // Predicated region
    $region66: #{tpu_custom_call.1} parent=1 // pred_check
      _
    $region67: #{tpu_custom_call.1} parent=1 // pred_check_branch
      %573 = sbr.rel (0) target = $region69
    $region68: #{tpu_custom_call.1} parent=1 // pred_region
      %s575 = ssub.s32 256, 256
      %576 = vsyncadd [#allocation4], %s575
      %s577 = sshll.u32 [#allocation12], 4
      %s578 = int_to_ptr.vmem [resolvable:$true] %s577
      %583 = dma.vmem_to_hbm [thread:$0]  %s578, 256, %s11, [#allocation4], 128, 128, 8
    $region69: #{tpu_custom_call.1} parent=1 // pred_fallthru
      _
    // Predicated region
    $region70: #{tpu_custom_call.1} parent=1 // pred_check
      _
    $region71: #{tpu_custom_call.1} parent=1 // pred_check_branch
      %585 = sbr.rel (0) target = $region73
    $region72: #{tpu_custom_call.1} parent=1 // pred_region
      %586 = dma.done [#allocation4], 256
    $region73: #{tpu_custom_call.1} parent=1 // pred_fallthru
      _
    %587 = vsyncpa [#allocation3], 1
    %588 = vsyncpa [#allocation7], 1
    %589 = vsyncpa [#allocation10], 1
    %590 = vsyncpa [#allocation4], 1
    %591 = vsyncpa [#allocation5], 1

</llo_original>
